<compile_context>
chip_gen: v7x
topology: tpu7x:2x2x1
jax: 0.10.0
libtpu: 0.0.40
codegen_flags: <defaults>
</compile_context>

<pallas_src>
import jax
import jax.numpy as jnp
from jax import lax
from jax.experimental import pallas as pl
from jax.experimental.pallas import tpu as pltpu


def _round_up(x, m):
    return ((x + m - 1) // m) * m


# ----------------------------------------------------------------------------
# Kernel A: stem conv (3x3, stride 2, valid) + folded BatchNorm + ReLU
# ----------------------------------------------------------------------------
def _stem_conv_kernel(p_ref, w_ref, scale_ref, shift_ref, o_ref):
    # p_ref:       (K, T)    bf16 im2col patches; contraction K on sublanes,
    #                        flattened (batch*spatial) tile T on the lane axis
    # w_ref:       (Cout, K) bf16 flattened conv weight (resident)
    # scale/shift: (Cout, 1) f32 folded eval-mode BatchNorm
    # o_ref:       (Cout, T) f32 channel-major, lane-dense output tile
    acc = jnp.dot(w_ref[...], p_ref[...],
                  preferred_element_type=jnp.float32)          # (Cout, T)
    y = acc * scale_ref[...] + shift_ref[...]
    o_ref[...] = jnp.maximum(y, 0.0)                           # ReLU


def stem_conv_bn_relu(img_nchw, w_oihw, bn_gamma, bn_beta, bn_mean, bn_var,
                      stride=2, eps=1e-3, spatial_tile=8192):
    N, Cin, H, W = img_nchw.shape
    Cout, _, KH, KW = w_oihw.shape
    Ho = (H - KH) // stride + 1
    Wo = (W - KW) // stride + 1
    P = Ho * Wo
    K = Cin * KH * KW

    # --- plain-JAX glue ------------------------------------------------------
    # bf16 image -> bf16 im2col taps: the HBM intermediate the kernel reads is
    # half the size of an f32 patch tensor, and the MXU is bf16-native.
    # TODO(synk): build the patches inside the kernel from a halo'd image tile
    # (memory_space=pl.ANY + manual DMA) to remove this HBM round trip.
    img_bf = img_nchw.astype(jnp.bfloat16)
    taps = []
    for i in range(KH):
        for j in range(KW):
            # (Cin, N, Ho, Wo); taps ordered (kh, kw)-minor so the flattened K
            # axis is (cin, kh, kw), matching w_oihw.reshape(Cout, Cin*KH*KW).
            taps.append(jnp.transpose(
                img_bf[:, :, i:i + stride * Ho:stride,
                       j:j + stride * Wo:stride], (1, 0, 2, 3)))
    patches = jnp.stack(taps, axis=1).reshape(K, N, P)          # (K, N, Ho*Wo)

    # Pad each image's spatial axis only to a multiple of 128 (not of T), then
    # flatten batch into the lane axis so small feature maps still fill big,
    # fully lane-dense tiles.
    P_pad = _round_up(P, 128)
    if P_pad != P:
        patches = jnp.pad(patches, ((0, 0), (0, 0), (0, P_pad - P)))
    L = N * P_pad
    patches = patches.reshape(K, L)

    # Lane tile: multiple of 128, big enough to amortize the ~0.35us/step grid
    # overhead, capped for VMEM; keep >=2 grid steps so v7x's two TensorCores
    # can split the "parallel" grid.
    spatial_tile = _round_up(spatial_tile, 128)
    T = min(spatial_tile, _round_up((L + 1) // 2, 128))
    L_pad = _round_up(L, T)
    if L_pad != L:
        patches = jnp.pad(patches, ((0, 0), (0, L_pad - L)))

    w_mat = w_oihw.reshape(Cout, K).astype(jnp.bfloat16)        # (Cout, K)
    inv_std = 1.0 / jnp.sqrt(bn_var + eps)
    scale = (bn_gamma * inv_std).reshape(Cout, 1).astype(jnp.float32)
    shift = (bn_beta - bn_mean * bn_gamma * inv_std
             ).reshape(Cout, 1).astype(jnp.float32)

    out = pl.pallas_call(
        _stem_conv_kernel,
        out_shape=jax.ShapeDtypeStruct((Cout, L_pad), jnp.float32),
        grid=(L_pad // T,),
        in_specs=[
            pl.BlockSpec((K, T), lambda t: (0, t)),
            pl.BlockSpec((Cout, K), lambda t: (0, 0)),
            pl.BlockSpec((Cout, 1), lambda t: (0, 0)),
            pl.BlockSpec((Cout, 1), lambda t: (0, 0)),
        ],
        out_specs=pl.BlockSpec((Cout, T), lambda t: (0, t)),
        compiler_params=pltpu.CompilerParams(
            dimension_semantics=("parallel",)),
    )(patches, w_mat, scale, shift)

    # Padded lanes carry shift+ReLU junk; they are sliced off here.
    # TODO(synk): emit bf16 and keep the (Cout, N*P) layout once the trunk
    # kernels consume it directly (halves stem writeback traffic).
    out = out[:, :L].reshape(Cout, N, P_pad)[:, :, :P]          # (Cout, N, P)
    return jnp.transpose(out, (1, 0, 2)).reshape(N, Cout, Ho, Wo)   # NCHW


# ----------------------------------------------------------------------------
# Kernel B: head = AdaptiveAvgPool2d(1) + Linear(1536, 3), batch-tiled
# ----------------------------------------------------------------------------
def _head_kernel(f_ref, w_ref, b_ref, o_ref):
    # f_ref: (TN*S, C) bf16 features; rows [n*S, (n+1)*S) belong to image n
    # w_ref: (nc, C)   f32, lane-dense (no pre-transpose to (C, nc))
    # b_ref: (1, nc)   f32
    # o_ref: (TN, nc)  f32
    tns = f_ref.shape[0]
    tn = o_ref.shape[0]
    s = tns // tn
    # Average pooling as a bf16 MXU matmul (block-diagonal ones matrix) with
    # f32 accumulation -> no (TN, S, C) f32 upcast materialized in VMEM.
    row = lax.broadcasted_iota(jnp.int32, (tn, tns), 0)
    col = lax.broadcasted_iota(jnp.int32, (tn, tns), 1)
    pool = jnp.where((col >= row * s) & (col < (row + 1) * s),
                     1.0, 0.0).astype(jnp.bfloat16)             # (TN, TN*S)
    pooled = jnp.dot(pool, f_ref[...],
                     preferred_element_type=jnp.float32) * (1.0 / s)  # (TN, C)
    out = lax.dot_general(pooled, w_ref[...],
                          dimension_numbers=(((1,), (1,)), ((), ())),
                          preferred_element_type=jnp.float32)   # (TN, nc)
    o_ref[...] = out + b_ref[...]


def head_avgpool_linear(feat_nchw, fc_w, fc_b, batch_tile=16):
    # fc_w: (num_classes, C) as in torch.nn.Linear; fc_b: (num_classes,)
    N, C, H, W = feat_nchw.shape
    nc = fc_w.shape[0]
    S = H * W

    # VMEM/step: TN*S*C bf16 = 3 MiB at TN=16 (x2 double-buffered = 6 MiB),
    # safe against v5e's 16 MiB default scoped VMEM and v7x's 64 MiB total.
    TN = min(batch_tile, N)
    N_pad = _round_up(N, TN)

    # bf16 features flattened to (N*S, C): the head is HBM-bound reading them.
    # TODO(synk): once the trunk kernels exist, have them emit (N*S, C) bf16
    # directly so this transpose+cast HBM pre-pass disappears.
    f = jnp.transpose(feat_nchw, (0, 2, 3, 1)).reshape(N * S, C)
    f = f.astype(jnp.bfloat16)
    if N_pad != N:
        f = jnp.pad(f, ((0, (N_pad - N) * S), (0, 0)))   # padded rows -> bias only, sliced off
    w = fc_w.astype(jnp.float32)                         # (nc, C) lane-dense
    b = fc_b.reshape(1, nc).astype(jnp.float32)

    out = pl.pallas_call(
        _head_kernel,
        out_shape=jax.ShapeDtypeStruct((N_pad, nc), jnp.float32),
        grid=(N_pad // TN,),
        in_specs=[
            pl.BlockSpec((TN * S, C), lambda n: (n, 0)),
            pl.BlockSpec((nc, C), lambda n: (0, 0)),
            pl.BlockSpec((1, nc), lambda n: (0, 0)),
        ],
        out_specs=pl.BlockSpec((TN, nc), lambda n: (n, 0)),
        compiler_params=pltpu.CompilerParams(
            dimension_semantics=("parallel",)),
    )(f, w, b)
    return out[:N]


# ----------------------------------------------------------------------------
# Net forward (Pallas version)
# ----------------------------------------------------------------------------
def net_forward(img, backbone_features, params):
    stem_out = stem_conv_bn_relu(
        img, params["stem_w"], params["bn_gamma"], params["bn_beta"],
        params["bn_mean"], params["bn_var"])
    # TODO(synk): InceptionResNetV2 trunk between the stem and the 1536-ch
    # feature map is not translated; `backbone_features` stands in for it.
    logits = head_avgpool_linear(backbone_features, params["fc_w"],
                                 params["fc_b"])
    return stem_out, logits


if __name__ == "__main__":
    key = jax.random.PRNGKey(0)
    ks = jax.random.split(key, 9)
    N = 2

    # small image consistent with the NCHW conv input (stem: 3x3 stride-2 valid)
    img = jax.random.normal(ks[0], (N, 3, 33, 33), dtype=jnp.float32)

    params = {
        # conv2d_1a: Conv2d(3, 32, kernel_size=3, stride=2, bias=False) + BN
        "stem_w": 0.1 * jax.random.normal(ks[1], (32, 3, 3, 3), dtype=jnp.float32),
        "bn_gamma": 1.0 + 0.1 * jax.random.normal(ks[2], (32,), dtype=jnp.float32),
        "bn_beta": 0.1 * jax.random.normal(ks[3], (32,), dtype=jnp.float32),
        "bn_mean": 0.1 * jax.random.normal(ks[4], (32,), dtype=jnp.float32),
        "bn_var": 1.0 + jnp.abs(jax.random.normal(ks[5], (32,), dtype=jnp.float32)),
        # replaced head: nn.Linear(in_features=1536, out_features=3)
        "fc_w": 0.02 * jax.random.normal(ks[6], (3, 1536), dtype=jnp.float32),
        "fc_b": 0.02 * jax.random.normal(ks[7], (3,), dtype=jnp.float32),
    }
    # deterministic stand-in for the (N, 1536, H, W) trunk output
    feat = jax.random.normal(ks[8], (N, 1536, 8, 8), dtype=jnp.float32)

    stem_out, logits = net_forward(img, feat, params)
    jax.block_until_ready((stem_out, logits))

    # ---- reference checks (plain JAX) ----
    # Deliberate precision choice: both kernels consume bf16 inputs (they are
    # HBM-bound), so the references are computed from the same bf16-cast
    # inputs with f32 accumulation.
    eps = 1e-3
    img_bf = img.astype(jnp.bfloat16).astype(jnp.float32)
    stem_w_bf = params["stem_w"].astype(jnp.bfloat16).astype(jnp.float32)
    ref_conv = lax.conv_general_dilated(
        img_bf, stem_w_bf, window_strides=(2, 2), padding="VALID",
        dimension_numbers=("NCHW", "OIHW", "NCHW"),
        precision=lax.Precision.HIGHEST)
    sc = params["bn_gamma"] / jnp.sqrt(params["bn_var"] + eps)
    sh = params["bn_beta"] - params["bn_mean"] * sc
    ref_stem = jnp.maximum(
        ref_conv * sc[None, :, None, None] + sh[None, :, None, None], 0.0)

    feat_bf = feat.astype(jnp.bfloat16).astype(jnp.float32)
    ref_logits = jnp.dot(feat_bf.mean(axis=(2, 3)), params["fc_w"].T,
                         precision=lax.Precision.HIGHEST) + params["fc_b"]

    assert stem_out.shape == (N, 32, 16, 16)
    assert logits.shape == (N, 3)
    assert jnp.allclose(stem_out, ref_stem, atol=2e-3, rtol=2e-3)
    assert jnp.allclose(logits, ref_logits, atol=3e-3, rtol=3e-3)

    print("KERNEL_OK")
</pallas_src>

<mosaic_0001>
module attributes {stable_mosaic.version = 11 : i64} {
  func.func @_stem_conv_kernel(%arg0: i32, %arg1: memref<27x256xbf16, #tpu.memory_space<vmem>>, %arg2: memref<32x27xbf16, #tpu.memory_space<vmem>>, %arg3: memref<32x1xf32, #tpu.memory_space<vmem>>, %arg4: memref<32x1xf32, #tpu.memory_space<vmem>>, %arg5: memref<32x256xf32, #tpu.memory_space<vmem>>) attributes {dimension_semantics = [#tpu.dimension_semantics<parallel>], iteration_bounds = array<i64: 2>, scalar_prefetch = 0 : i64, scratch_operands = 0 : i64, tpu.core_type = #tpu.core_type<tc>, window_params = [{transform_indices = @transform_0, window_bounds = array<i64: 27, 256>}, {pipeline_mode = #tpu.pipeline_mode<synchronous>, transform_indices = @transform_1, window_bounds = array<i64: 32, 27>}, {pipeline_mode = #tpu.pipeline_mode<synchronous>, transform_indices = @transform_2, window_bounds = array<i64: 32, 1>}, {pipeline_mode = #tpu.pipeline_mode<synchronous>, transform_indices = @transform_3, window_bounds = array<i64: 32, 1>}, {transform_indices = @transform_4, window_bounds = array<i64: 32, 256>}]} {
    %c0 = arith.constant 0 : index
    %c0_0 = arith.constant 0 : index
    %0 = vector.load %arg2[%c0, %c0_0] : memref<32x27xbf16, #tpu.memory_space<vmem>>, vector<32x27xbf16>
    %c0_1 = arith.constant 0 : index
    %c0_2 = arith.constant 0 : index
    %1 = vector.load %arg1[%c0_1, %c0_2] : memref<27x256xbf16, #tpu.memory_space<vmem>>, vector<27x256xbf16>
    %cst = arith.constant dense<0.000000e+00> : vector<32x256xf32>
    %2 = tpu.matmul %0, %1, %cst {dimension_numbers = #tpu.dot_dimension_numbers<[1], [0], [0], [1], [0, 0, 1, 1], [], []>} : vector<32x27xbf16>, vector<27x256xbf16>, vector<32x256xf32> -> vector<32x256xf32>
    %c0_3 = arith.constant 0 : index
    %c0_4 = arith.constant 0 : index
    %3 = vector.load %arg3[%c0_3, %c0_4] : memref<32x1xf32, #tpu.memory_space<vmem>>, vector<32x1xf32>
    %4 = vector.broadcast %3 : vector<32x1xf32> to vector<32x256xf32>
    %5 = arith.mulf %2, %4 : vector<32x256xf32>
    %c0_5 = arith.constant 0 : index
    %c0_6 = arith.constant 0 : index
    %6 = vector.load %arg4[%c0_5, %c0_6] : memref<32x1xf32, #tpu.memory_space<vmem>>, vector<32x1xf32>
    %7 = vector.broadcast %6 : vector<32x1xf32> to vector<32x256xf32>
    %8 = arith.addf %5, %7 : vector<32x256xf32>
    %cst_7 = arith.constant 0.000000e+00 : f32
    %9 = vector.broadcast %cst_7 : f32 to vector<32x256xf32>
    %10 = arith.maximumf %8, %9 : vector<32x256xf32>
    %c0_8 = arith.constant 0 : index
    %c0_9 = arith.constant 0 : index
    %11 = vector.load %arg5[%c0_8, %c0_9] : memref<32x256xf32, #tpu.memory_space<vmem>>, vector<32x256xf32>
    tpu.vector_store %arg5[%c0_8, %c0_9], %10 {strides = array<i32>} : memref<32x256xf32, #tpu.memory_space<vmem>>, vector<32x256xf32>,
    return
  }
  func.func @transform_0(%arg0: i32) -> (i32, i32) {
    %c0_i32 = arith.constant 0 : i32
    %c0_i32_0 = arith.constant 0 : i32
    return %c0_i32, %arg0 : i32, i32
  }
  func.func @transform_1(%arg0: i32) -> (i32, i32) {
    %c0_i32 = arith.constant 0 : i32
    %c0_i32_0 = arith.constant 0 : i32
    %c0_i32_1 = arith.constant 0 : i32
    return %c0_i32, %c0_i32_0 : i32, i32
  }
  func.func @transform_2(%arg0: i32) -> (i32, i32) {
    %c0_i32 = arith.constant 0 : i32
    %c0_i32_0 = arith.constant 0 : i32
    %c0_i32_1 = arith.constant 0 : i32
    return %c0_i32, %c0_i32_0 : i32, i32
  }
  func.func @transform_3(%arg0: i32) -> (i32, i32) {
    %c0_i32 = arith.constant 0 : i32
    %c0_i32_0 = arith.constant 0 : i32
    %c0_i32_1 = arith.constant 0 : i32
    return %c0_i32, %c0_i32_0 : i32, i32
  }
  func.func @transform_4(%arg0: i32) -> (i32, i32) {
    %c0_i32 = arith.constant 0 : i32
    %c0_i32_0 = arith.constant 0 : i32
    return %c0_i32, %arg0 : i32, i32
  }
}

</mosaic_0001>

<llo_original>
// kernel: tpu_custom_call.1
$region0: #{tpu_custom_call.1}
  #allocation0 [shape = 'u32[]', space=smem, size = 0x4, offset = 0x4, fixed_abs, tag = 'smem constant byte address 0x4 - core index']
  #allocation1 [shape = 'u32[144,128]{1,0:T(1,128)}', space=vmem, size = 0x12000, scoped, tag = 'internal scratch']
  %s0 = inlined_call_operand.vmem [shape: bf16[27,512], index: 0, kind: input, shape index: {}]
  %s1 = inlined_call_operand.hbm [shape: bf16[32,27], index: 1, kind: input, shape index: {}]
  %s2 = inlined_call_operand.vmem [shape: f32[32,1], index: 2, kind: input, shape index: {}]
  %s3 = inlined_call_operand.vmem [shape: f32[32,1], index: 3, kind: input, shape index: {}]
  %s4 = inlined_call_operand.hbm [shape: f32[32,512], index: 4, kind: output, shape index: {}]
  %s5 = sld [smem:[#allocation0]]
  $region91: #{tpu_custom_call.1} parent=0
    _
  %s7 = ssub.s32 1, %s5
  %s8 = scalar_select 0, %s7, %s5
  $region1: #{tpu_custom_call.1} parent=0
    #allocation2 [shape = 'u8[32768]{0}', space=vmem, size = 0x8000, scoped, tag = 'input window, operand 0']
    #allocation3 [shape = 'u8[8192]{0}', space=vmem, size = 0x2000, scoped, tag = 'input window, operand 1, single buffered']
    #allocation4 [shape = 's32[2]{0}', space=sflag, size = 0x8, scoped, tag = 'scoped memory for tpu_custom_call.1']
    #allocation5 [shape = 's32[2]{0}', space=sflag, size = 0x8, scoped, tag = 'scoped memory for tpu_custom_call.1']
    #allocation6 [shape = 'u8[65536]{0}', space=vmem, size = 0x10000, scoped, tag = 'output window, operand 0']
    %9 = vsyncpa [#allocation4], 0
    %10 = vsyncpa [#allocation5], 0
    %s11 = scalar_lea.sflag [#allocation5], 1
    %12 = vsyncpa %s11, 0
    loop: start=0, step=1, limit=4
    $region2: #{tpu_custom_call.1} parent=1 // loop_pre_header
      _
    $region3: #{tpu_custom_call.1} parent=1 // loop_header
      %s14 = sphi 0, %s18
      %p15 = scmp.ge.s32.totalorder %s14, 4
      %s24 = sphi 0, %s26
      %s27 = sphi 0, %s24
      %s28 = sphi 0, %s27
      %s44 = sphi 0, %s28
      %s48 = sphi 0, %s48
      %s50 = sphi 0, %s48
      %s51 = sphi 0, %s50
      %s65 = sphi 0, %s51
      %s69 = sphi 0, %s69
      %s71 = sphi 0, %s69
      %s72 = sphi 0, %s71
      %s86 = sphi 0, %s72
      %s90 = sphi 0, %s90
      %s92 = sphi 0, %s90
      %s93 = sphi 0, %s92
      %s107 = sphi 0, %s93
      %s113 = sphi 0, %s115
      %s116 = sphi 0, %s113
      %s117 = sphi 0, %s116
      %s133 = sphi 0, %s117
    $region4: #{tpu_custom_call.1} parent=1 // loop_header_branch
      %17 = sbr.rel (%p15) target = $region8
    $region5: #{tpu_custom_call.1} parent=1 // loop_body
      %s19 = ssub.s32 %s14, 1
      %s20 = ssub.s32 %s14, 2
      %s21 = sadd.s32 %s14, 1
      %s22 = ssub.s32 %s14, %s21
      %p23 = scmp.eq.s32.totalorder %s22, 0
      %s25 = sadd.s32 %s24, 1
      %s26 = scalar_select %p23, %s24, %s25
      %p29 = pneg %p23
      %p30 = scmp.eq.s32.totalorder %s14, 1
      %p31 = por %p29, %p30
      %p32 = scmp.ne.s32.totalorder %s24, %s27
      %p33 = scmp.eq.s32.totalorder %s14, 0
      %p34 = por %p32, %p33
      %p35 = scmp.ne.s32.totalorder %s24, %s27
      %p36 = scmp.eq.s32.totalorder %s19, 1
      %p37 = por %p35, %p36
      %p38 = scmp.ne.s32.totalorder %s27, %s28
      %p39 = scmp.eq.s32.totalorder %s19, 0
      %p40 = por %p38, %p39
      %p41 = scmp.ne.s32.totalorder %s27, %s28
      %p42 = scmp.eq.s32.totalorder %s20, 1
      %p43 = por %p41, %p42
      %p45 = scmp.ne.s32.totalorder %s28, %s44
      %p46 = scmp.eq.s32.totalorder %s20, 0
      %p47 = por %p45, %p46
      %s49 = sadd.s32 %s48, 1
      %p52 = scmp.eq.s32.totalorder %s14, 1
      %p53 = scmp.ne.s32.totalorder %s48, %s50
      %p54 = scmp.eq.s32.totalorder %s14, 0
      %p55 = por %p53, %p54
      %p56 = scmp.ne.s32.totalorder %s48, %s50
      %p57 = scmp.eq.s32.totalorder %s19, 1
      %p58 = por %p56, %p57
      %p59 = scmp.ne.s32.totalorder %s50, %s51
      %p60 = scmp.eq.s32.totalorder %s19, 0
      %p61 = por %p59, %p60
      %p62 = scmp.ne.s32.totalorder %s50, %s51
      %p63 = scmp.eq.s32.totalorder %s20, 1
      %p64 = por %p62, %p63
      %p66 = scmp.ne.s32.totalorder %s51, %s65
      %p67 = scmp.eq.s32.totalorder %s20, 0
      %p68 = por %p66, %p67
      %s70 = sadd.s32 %s69, 1
      %p73 = scmp.eq.s32.totalorder %s14, 1
      %p74 = scmp.ne.s32.totalorder %s69, %s71
      %p75 = scmp.eq.s32.totalorder %s14, 0
      %p76 = por %p74, %p75
      %p77 = scmp.ne.s32.totalorder %s69, %s71
      %p78 = scmp.eq.s32.totalorder %s19, 1
      %p79 = por %p77, %p78
      %p80 = scmp.ne.s32.totalorder %s71, %s72
      %p81 = scmp.eq.s32.totalorder %s19, 0
      %p82 = por %p80, %p81
      %p83 = scmp.ne.s32.totalorder %s71, %s72
      %p84 = scmp.eq.s32.totalorder %s20, 1
      %p85 = por %p83, %p84
      %p87 = scmp.ne.s32.totalorder %s72, %s86
      %p88 = scmp.eq.s32.totalorder %s20, 0
      %p89 = por %p87, %p88
      %s91 = sadd.s32 %s90, 1
      %p94 = scmp.eq.s32.totalorder %s14, 1
      %p95 = scmp.ne.s32.totalorder %s90, %s92
      %p96 = scmp.eq.s32.totalorder %s14, 0
      %p97 = por %p95, %p96
      %p98 = scmp.ne.s32.totalorder %s90, %s92
      %p99 = scmp.eq.s32.totalorder %s19, 1
      %p100 = por %p98, %p99
      %p101 = scmp.ne.s32.totalorder %s92, %s93
      %p102 = scmp.eq.s32.totalorder %s19, 0
      %p103 = por %p101, %p102
      %p104 = scmp.ne.s32.totalorder %s92, %s93
      %p105 = scmp.eq.s32.totalorder %s20, 1
      %p106 = por %p104, %p105
      %p108 = scmp.ne.s32.totalorder %s93, %s107
      %p109 = scmp.eq.s32.totalorder %s20, 0
      %p110 = por %p108, %p109
      %s111 = ssub.s32 %s14, %s21
      %p112 = scmp.eq.s32.totalorder %s111, 0
      %s114 = sadd.s32 %s113, 1
      %s115 = scalar_select %p112, %s113, %s114
      %p118 = pneg %p112
      %p119 = scmp.eq.s32.totalorder %s14, 1
      %p120 = por %p118, %p119
      %p121 = scmp.ne.s32.totalorder %s113, %s116
      %p122 = scmp.eq.s32.totalorder %s14, 0
      %p123 = por %p121, %p122
      %p124 = scmp.ne.s32.totalorder %s113, %s116
      %p125 = scmp.eq.s32.totalorder %s19, 1
      %p126 = por %p124, %p125
      %p127 = scmp.ne.s32.totalorder %s116, %s117
      %p128 = scmp.eq.s32.totalorder %s19, 0
      %p129 = por %p127, %p128
      %p130 = scmp.ne.s32.totalorder %s116, %s117
      %p131 = scmp.eq.s32.totalorder %s20, 1
      %p132 = por %p130, %p131
      %p134 = scmp.ne.s32.totalorder %s117, %s133
      %p135 = scmp.eq.s32.totalorder %s20, 0
      %p136 = por %p134, %p135
      %p137 = scmp.le.s32.totalorder 1, %s14
      %p138 = scmp.lt.s32.totalorder %s14, 3
      %p139 = pnand %p137, %p138
      %p140 = pneg %p139
      // Predicated region
      $region9: #{tpu_custom_call.1} parent=5 // pred_check
        _
      $region10: #{tpu_custom_call.1} parent=5 // pred_check_branch
        %142 = sbr.rel (%p139) target = $region12
      $region11: #{tpu_custom_call.1} parent=5 // pred_region
        %s143 = ssub.s32 %s14, 1
        // Predicated region
        $region13: #{tpu_custom_call.1} parent=11 // pred_check
          %p144 = pneg %p61
        $region14: #{tpu_custom_call.1} parent=11 // pred_check_branch
          %146 = sbr.rel (%p144) target = $region16
        $region15: #{tpu_custom_call.1} parent=11 // pred_region
          %s148 = ssub.s32 256, 256
          %149 = vsyncadd [#allocation4], %s148
          %s150 = sshll.u32 [#allocation3], 4
          %s151 = int_to_ptr.vmem [resolvable:$true] %s150
          %156 = dma.hbm_to_vmem [thread:$0]  %s1, 256, %s151, [#allocation4], 64, 64, 4
        $region16: #{tpu_custom_call.1} parent=11 // pred_fallthru
          _
        // Predicated region
        $region17: #{tpu_custom_call.1} parent=11 // pred_check
          %p157 = pneg %p82
        $region18: #{tpu_custom_call.1} parent=11 // pred_check_branch
          %159 = sbr.rel (%p157) target = $region20
        $region19: #{tpu_custom_call.1} parent=11 // pred_region
          _
        $region20: #{tpu_custom_call.1} parent=11 // pred_fallthru
          _
        // Predicated region
        $region21: #{tpu_custom_call.1} parent=11 // pred_check
          %p160 = pneg %p103
        $region22: #{tpu_custom_call.1} parent=11 // pred_check_branch
          %162 = sbr.rel (%p160) target = $region24
        $region23: #{tpu_custom_call.1} parent=11 // pred_region
          _
        $region24: #{tpu_custom_call.1} parent=11 // pred_fallthru
          _
      $region12: #{tpu_custom_call.1} parent=5 // pred_fallthru
        _
      %p163 = scmp.lt.s32.totalorder %s14, 2
      // Predicated region
      $region25: #{tpu_custom_call.1} parent=5 // pred_check
        %p164 = pneg %p163
      $region26: #{tpu_custom_call.1} parent=5 // pred_check_branch
        %166 = sbr.rel (%p164) target = $region28
      $region27: #{tpu_custom_call.1} parent=5 // pred_region
        // Predicated region
        $region29: #{tpu_custom_call.1} parent=27 // pred_check
          %p167 = pneg %p34
        $region30: #{tpu_custom_call.1} parent=27 // pred_check_branch
          %169 = sbr.rel (%p167) target = $region32
        $region31: #{tpu_custom_call.1} parent=27 // pred_region
          %s170 = sand.u32 %s24, 1
          %s171 = sand.u32 %s24, 1
          %s172 = smul.addr %s171, 32
          %s173 = scalar_lea.vmem [#allocation2], %s172
          %s174 = smul.u32 2, %s14
          %s175 = smul.addr %s174, 4
          %s176 = scalar_lea.vmem %s0, %s175
          // Predicated region
          $region33: #{tpu_custom_call.1} parent=31 // pred_check
            _
          $region34: #{tpu_custom_call.1} parent=31 // pred_check_branch
            %178 = sbr.rel (0) target = $region36
          $region35: #{tpu_custom_call.1} parent=31 // pred_region
            // Predicated region
            $region37: #{tpu_custom_call.1} parent=35 // pred_check
              _
            $region38: #{tpu_custom_call.1} parent=35 // pred_check_branch
              %180 = sbr.rel (0) target = $region40
            $region39: #{tpu_custom_call.1} parent=35 // pred_region
              // Predicated region
              $region52: #{tpu_custom_call.1} parent=39 // pred_check
                _
              $region53: #{tpu_custom_call.1} parent=39 // pred_check_branch
                %201 = sbr.rel (0) target = $region55
              $region54: #{tpu_custom_call.1} parent=39 // pred_region
                loop: start=0, step=1, limit=1
                $region56: #{tpu_custom_call.1} parent=54 // loop_pre_header
                  _
                $region57: #{tpu_custom_call.1} parent=54 // loop_header
                  %s203 = sphi 0, %s207
                  %p204 = scmp.ge.s32.totalorder %s203, 1
                  %s208 = sphi %s176, %s176
                  %s209 = sphi %s173, %s173
                $region58: #{tpu_custom_call.1} parent=54 // loop_header_branch
                  %206 = sbr.rel (%p204) target = $region62
                $region59: #{tpu_custom_call.1} parent=54 // loop_body
                  %v210 = vld [vmem:[%s208] sm:$0xff]
                  %211 = vst [vmem:[%s209] sm:$0xff] %v210
                  %v212 = vld [vmem:[%s208 + $0x10] sm:$0xff]
                  %213 = vst [vmem:[%s209 + $0x8] sm:$0xff] %v212
                  %v214 = vld [vmem:[%s208 + $0x20] sm:$0xff]
                  %215 = vst [vmem:[%s209 + $0x10] sm:$0xff] %v214
                  %v216 = vld [vmem:[%s208 + $0x30] sm:$0xff]
                  %217 = vst [vmem:[%s209 + $0x18] sm:$0xff] %v216
                $region60: #{tpu_custom_call.1} parent=54 // loop_footer
                  %s207 = sadd.s32 1, %s203
                $region61: #{tpu_custom_call.1} parent=54 // loop_footer_branch
                  %202 = sbr.rel target = $region57
                $region62: #{tpu_custom_call.1} parent=54 // loop_exit
                  _
              $region55: #{tpu_custom_call.1} parent=39 // pred_fallthru
                _
              // Predicated region
              $region63: #{tpu_custom_call.1} parent=39 // pred_check
                _
              $region64: #{tpu_custom_call.1} parent=39 // pred_check_branch
                %219 = sbr.rel target = $region66
              $region65: #{tpu_custom_call.1} parent=39 // pred_region
                _
              $region66: #{tpu_custom_call.1} parent=39 // pred_fallthru
                _
            $region40: #{tpu_custom_call.1} parent=35 // pred_fallthru
              _
            // Predicated region
            $region41: #{tpu_custom_call.1} parent=35 // pred_check
              _
            $region42: #{tpu_custom_call.1} parent=35 // pred_check_branch
              %182 = sbr.rel target = $region44
            $region43: #{tpu_custom_call.1} parent=35 // pred_region
              loop: start=0, step=1, limit=1
              $region45: #{tpu_custom_call.1} parent=43 // loop_pre_header
                _
              $region46: #{tpu_custom_call.1} parent=43 // loop_header
                %s185 = sphi 0, %s189
                %p186 = scmp.ge.s32.totalorder %s185, 1
                %s190 = sphi %s176, %s176
                %s191 = sphi %s173, %s173
              $region47: #{tpu_custom_call.1} parent=43 // loop_header_branch
                %188 = sbr.rel (%p186) target = $region51
              $region48: #{tpu_custom_call.1} parent=43 // loop_body
                %v192 = vld [vmem:[%s190] sm:$0xff]
                %193 = vst [vmem:[%s191] sm:$0xff] %v192
                %v194 = vld [vmem:[%s190 + $0x10] sm:$0xff]
                %195 = vst [vmem:[%s191 + $0x8] sm:$0xff] %v194
                %v196 = vld [vmem:[%s190 + $0x20] sm:$0xff]
                %197 = vst [vmem:[%s191 + $0x10] sm:$0xff] %v196
                %v198 = vld [vmem:[%s190 + $0x30] sm:$0xff]
                %199 = vst [vmem:[%s191 + $0x18] sm:$0xff] %v198
              $region49: #{tpu_custom_call.1} parent=43 // loop_footer
                %s189 = sadd.s32 1, %s185
              $region50: #{tpu_custom_call.1} parent=43 // loop_footer_branch
                %184 = sbr.rel target = $region46
              $region51: #{tpu_custom_call.1} parent=43 // loop_exit
                _
            $region44: #{tpu_custom_call.1} parent=35 // pred_fallthru
              _
          $region36: #{tpu_custom_call.1} parent=31 // pred_fallthru
            _
          %220 = vnop
        $region32: #{tpu_custom_call.1} parent=27 // pred_fallthru
          _
      $region28: #{tpu_custom_call.1} parent=5 // pred_fallthru
        _
      %p221 = scmp.le.s32.totalorder 1, %s14
      %p222 = scmp.lt.s32.totalorder %s14, 3
      %p223 = pnand %p221, %p222
      %p224 = pneg %p223
      // Predicated region
      $region67: #{tpu_custom_call.1} parent=5 // pred_check
        _
      $region68: #{tpu_custom_call.1} parent=5 // pred_check_branch
        %226 = sbr.rel (%p223) target = $region70
      $region69: #{tpu_custom_call.1} parent=5 // pred_region
        %s227 = ssub.s32 %s14, 1
        %s228 = sand.u32 %s27, 1
        %s229 = sand.u32 %s27, 1
        %s230 = smul.addr %s229, 32
        %s231 = scalar_lea.vmem [#allocation2], %s230
        // Predicated region
        $region71: #{tpu_custom_call.1} parent=69 // pred_check
          %p232 = pneg %p40
        $region72: #{tpu_custom_call.1} parent=69 // pred_check_branch
          %234 = sbr.rel (%p232) target = $region74
        $region73: #{tpu_custom_call.1} parent=69 // pred_region
          _
        $region74: #{tpu_custom_call.1} parent=69 // pred_fallthru
          _
        // Predicated region
        $region75: #{tpu_custom_call.1} parent=69 // pred_check
          %p235 = pneg %p61
        $region76: #{tpu_custom_call.1} parent=69 // pred_check_branch
          %237 = sbr.rel (%p235) target = $region78
        $region77: #{tpu_custom_call.1} parent=69 // pred_region
          %238 = dma.done [#allocation4], 256
        $region78: #{tpu_custom_call.1} parent=69 // pred_fallthru
          _
        %s239 = sand.u32 %s27, 1
        %s240 = sand.u32 %s27, 1
        %s241 = smul.addr %s240, 32
        %s242 = scalar_lea.vmem [#allocation2], %s241
        %p243 = pneg %p40
        %p244 = pneg %p37
        %p245 = pneg %p61
        %p246 = pneg %p58
        %p247 = pneg %p82
        %p248 = pneg %p79
        %p249 = pneg %p103
        %p250 = pneg %p100
        %p251 = pneg %p129
        %p252 = pneg %p126
        %s253 = sand.u32 %s116, 1
        %s254 = scalar_lea.sflag [#allocation5], %s253
        %s255 = sand.u32 %s116, 1
        %s256 = smul.addr %s255, 64
        %s257 = scalar_lea.vmem [#allocation6], %s256
        %s258 = smul.u32 2, %s19
        %s259 = smul.u32 2, %s19
        %v261 = vld [vmem:[#allocation3] sm:$0xf]
        %v262 = vld [vmem:[#allocation3 + $0x4] sm:$0xf]
        %v263 = vld [vmem:[#allocation3 + $0x8] sm:$0xf]
        %v264 = vld [vmem:[#allocation3 + $0xc] sm:$0xf]
        %v265 = vld [vmem:[%s231] sm:$0xff]
        %v266 = vld [vmem:[%s231 + $0x8] sm:$0xff]
        %v267 = vld [vmem:[%s231 + $0x10] sm:$0xff]
        %v268 = vld [vmem:[%s231 + $0x18] sm:$0x33]
        %v273 = vunpack.c.l.b16 %v261
        %v274 = vunpack.c.l.b16 %v262
        %v275 = vunpack.c.l.b16 %v263
        %v276 = vunpack.c.l.b16 %v264
        %v277 = vpack.c.b16 %v274, %v273
        %v278 = vpack.c.b16 %v276, %v275
        %v283 = vunpack.c.l.b16 %v265
        %v284 = vunpack.c.h.b16 %v265
        %v285 = vunpack.c.l.b16 %v266
        %v286 = vunpack.c.h.b16 %v266
        %v287 = vunpack.c.l.b16 %v267
        %v288 = vunpack.c.h.b16 %v267
        %v289 = vunpack.c.l.b16 %v268
        %v290 = vunpack.c.h.b16 %v268
        %v291 = vpack.c.b16 %v285, %v283
        %v292 = vpack.c.b16 %v286, %v284
        %v293 = vpack.c.b16 %v289, %v287
        %v294 = vpack.c.b16 %v290, %v288
        %vm297 = vcmask 220160
        %v299 = vsel %vm297, %v277, 0
        %v302 = vsel %vm297, %v278, 0
        %vm304 = vcmask 1044480
        %vm305 = vcmask 1045504
        %v306 = vsel %vm304, 4294967295, 65535
        %v307 = vsel %vm305, %v306, 0
        %v309 = vand.u32 %v293, %v307
        %v312 = vand.u32 %v294, %v307
        %314 = vmatprep.subr.bf16.mxu0 %v292
        %315 = vmatpush1.bf16.msra.mxu0 %v291
        %316 = vmatprep.subr.bf16.mxu0 %v312
        %317 = vmatpush1.bf16.msra.mxu0 %v309
        %318 = vmatprep.subr.bf16.mxu0 0
        %319 = vmatpush1.bf16.msra.mxu0 0
        %320 = vmatprep.subr.bf16.mxu0 0
        %321 = vmatpush1.bf16.msra.mxu0 0
        %322 = vmatprep.subr.bf16.mxu0 0
        %323 = vmatpush1.bf16.msra.mxu0 0
        %324 = vmatprep.subr.bf16.mxu0 0
        %325 = vmatpush1.bf16.msra.mxu0 0
        %326 = vmatprep.subr.bf16.mxu0 0
        %327 = vmatpush1.bf16.msra.mxu0 0
        %328 = vmatprep.subr.bf16.mxu0 0
        %329 = vmatpush1.bf16.msra.mxu0 0
        %330 = vmatprep.subr.bf16.mxu0 0
        %331 = vmatpush1.bf16.msra.mxu0 0
        %332 = vmatprep.subr.bf16.mxu0 0
        %333 = vmatpush1.bf16.msra.mxu0 0
        %334 = vmatprep.subr.bf16.mxu0 0
        %335 = vmatpush1.bf16.msra.mxu0 0
        %336 = vmatprep.subr.bf16.mxu0 0
        %337 = vmatpush1.bf16.msra.mxu0 0
        %338 = vmatprep.subr.bf16.mxu0 0
        %339 = vmatpush1.bf16.msra.mxu0 0
        %340 = vmatprep.subr.bf16.mxu0 0
        %341 = vmatpush1.bf16.msra.mxu0 0
        %342 = vmatprep.subr.bf16.mxu0 0
        %343 = vmatpush1.bf16.msra.mxu0 0
        %344 = vmatprep.subr.bf16.mxu0 0
        %345 = vmatpush1.bf16.msra.mxu0 0
        %346 = vmatprep.mubr.bf16.mxu0 0
        %347 = vmatmul.mubr.bf16.gmra.mrb[0].mxu0 %v299
        %v348 = vpop.f32.mrb[0].mxu0
        %v349 = vadd.f32 0.0, %v348
        %v350 = vpop.f32.mrb[0].mxu0
        %v351 = vadd.f32 0.0, %v350
        %v352 = vpop.f32.mrb[0].mxu0
        %v353 = vadd.f32 0.0, %v352
        %v354 = vpop.f32.mrb[0].mxu0
        %v355 = vadd.f32 0.0, %v354
        %356 = vmatprep.mubr.bf16.mxu0 0
        %357 = vmatmul.mubr.bf16.gmra.mrb[0].mxu0 %v302
        %v358 = vpop.f32.mrb[0].mxu0
        %v359 = vadd.f32 0.0, %v358
        %v360 = vpop.f32.mrb[0].mxu0
        %v361 = vadd.f32 0.0, %v360
        %v362 = vpop.f32.mrb[0].mxu0
        %v363 = vadd.f32 0.0, %v362
        %v364 = vpop.f32.mrb[0].mxu0
        %v365 = vadd.f32 0.0, %v364
        %366 = vdwg.mxu0
        %v367 = vld [vmem:[%s2] sm:$0xff]
        %v368 = vld [vmem:[%s2 + $0x8] sm:$0xff]
        %v369 = vld [vmem:[%s2 + $0x10] sm:$0xff]
        %v370 = vld [vmem:[%s2 + $0x18] sm:$0xff]
        %372 = vset.pattern.permute.xlu0 0
        %373 = vperm.xlu0 %372, %v367
        %v374 = vpop.permute.xlu0 %373
        %377 = vset.pattern.permute.xlu0 0
        %378 = vperm.xlu0 %377, %v368
        %v379 = vpop.permute.xlu0 %378
        %382 = vset.pattern.permute.xlu0 0
        %383 = vperm.xlu0 %382, %v369
        %v384 = vpop.permute.xlu0 %383
        %387 = vset.pattern.permute.xlu0 0
        %388 = vperm.xlu0 %387, %v370
        %v389 = vpop.permute.xlu0 %388
        %v391 = vmul.f32 %v349, %v374
        %v392 = vmul.f32 %v351, %v374
        %v393 = vmul.f32 %v353, %v379
        %v394 = vmul.f32 %v355, %v379
        %v395 = vmul.f32 %v359, %v384
        %v396 = vmul.f32 %v361, %v384
        %v397 = vmul.f32 %v363, %v389
        %v398 = vmul.f32 %v365, %v389
        %v399 = vld [vmem:[%s3] sm:$0xff]
        %v400 = vld [vmem:[%s3 + $0x8] sm:$0xff]
        %v401 = vld [vmem:[%s3 + $0x10] sm:$0xff]
        %v402 = vld [vmem:[%s3 + $0x18] sm:$0xff]
        %404 = vset.pattern.permute.xlu0 0
        %405 = vperm.xlu0 %404, %v399
        %v406 = vpop.permute.xlu0 %405
        %409 = vset.pattern.permute.xlu0 0
        %410 = vperm.xlu0 %409, %v400
        %v411 = vpop.permute.xlu0 %410
        %414 = vset.pattern.permute.xlu0 0
        %415 = vperm.xlu0 %414, %v401
        %v416 = vpop.permute.xlu0 %415
        %419 = vset.pattern.permute.xlu0 0
        %420 = vperm.xlu0 %419, %v402
        %v421 = vpop.permute.xlu0 %420
        %v423 = vadd.f32 %v391, %v406
        %v424 = vadd.f32 %v392, %v406
        %v425 = vadd.f32 %v393, %v411
        %v426 = vadd.f32 %v394, %v411
        %v427 = vadd.f32 %v395, %v416
        %v428 = vadd.f32 %v396, %v416
        %v429 = vadd.f32 %v397, %v421
        %v430 = vadd.f32 %v398, %v421
        %v431 = vmax.f32 %v423, 0.0
        %v432 = vmax.f32 %v424, 0.0
        %v433 = vmax.f32 %v425, 0.0
        %v434 = vmax.f32 %v426, 0.0
        %v435 = vmax.f32 %v427, 0.0
        %v436 = vmax.f32 %v428, 0.0
        %v437 = vmax.f32 %v429, 0.0
        %v438 = vmax.f32 %v430, 0.0
        %439 = vst [vmem:[%s257] sm:$0xff] %v431
        %440 = vst [vmem:[%s257 + $0x8] sm:$0xff] %v432
        %441 = vst [vmem:[%s257 + $0x10] sm:$0xff] %v433
        %442 = vst [vmem:[%s257 + $0x18] sm:$0xff] %v434
        %443 = vst [vmem:[%s257 + $0x20] sm:$0xff] %v435
        %444 = vst [vmem:[%s257 + $0x28] sm:$0xff] %v436
        %445 = vst [vmem:[%s257 + $0x30] sm:$0xff] %v437
        %446 = vst [vmem:[%s257 + $0x38] sm:$0xff] %v438
        %s447 = sand.u32 %s116, 1
        %s448 = scalar_lea.sflag [#allocation5], %s447
        %s449 = sand.u32 %s116, 1
        %s450 = smul.addr %s449, 64
        %s451 = scalar_lea.vmem [#allocation6], %s450
        // Predicated region
        $region79: #{tpu_custom_call.1} parent=69 // pred_check
          %p452 = pneg %p126
        $region80: #{tpu_custom_call.1} parent=69 // pred_check_branch
          %454 = sbr.rel (%p452) target = $region82
        $region81: #{tpu_custom_call.1} parent=69 // pred_region
          %s455 = smul.u32 2, %s19
          %s457 = ssub.s32 1024, 1024
          %458 = vsyncadd %s448, %s457
          %s459 = smul.addr %s455, 128
          %s460 = scalar_lea.hbm %s4, %s459
          %s461 = sshll.u32 %s451, 4
          %s462 = int_to_ptr.vmem [resolvable:$true] %s461
          %467 = dma.vmem_to_hbm [thread:$0]  %s462, 1024, %s460, %s448, 256, 512, 16
        $region82: #{tpu_custom_call.1} parent=69 // pred_fallthru
          _
      $region70: #{tpu_custom_call.1} parent=5 // pred_fallthru
        _
      %p468 = scmp.le.s32.totalorder 2, %s14
      // Predicated region
      $region83: #{tpu_custom_call.1} parent=5 // pred_check
        %p469 = pneg %p468
      $region84: #{tpu_custom_call.1} parent=5 // pred_check_branch
        %471 = sbr.rel (%p469) target = $region86
      $region85: #{tpu_custom_call.1} parent=5 // pred_region
        %s472 = ssub.s32 %s14, 2
        // Predicated region
        $region87: #{tpu_custom_call.1} parent=85 // pred_check
          %p473 = pneg %p132
        $region88: #{tpu_custom_call.1} parent=85 // pred_check_branch
          %475 = sbr.rel (%p473) target = $region90
        $region89: #{tpu_custom_call.1} parent=85 // pred_region
          %s476 = sand.u32 %s117, 1
          %s477 = scalar_lea.sflag [#allocation5], %s476
          %s478 = sand.u32 %s117, 1
          %s479 = smul.addr %s478, 64
          %s480 = scalar_lea.vmem [#allocation6], %s479
          %481 = dma.done %s477, 1024
        $region90: #{tpu_custom_call.1} parent=85 // pred_fallthru
          _
      $region86: #{tpu_custom_call.1} parent=5 // pred_fallthru
        _
    $region6: #{tpu_custom_call.1} parent=1 // loop_footer
      %s18 = sadd.s32 1, %s14
    $region7: #{tpu_custom_call.1} parent=1 // loop_footer_branch
      %13 = sbr.rel target = $region3
    $region8: #{tpu_custom_call.1} parent=1 // loop_exit
      _
    %482 = vsyncpa [#allocation4], 1
    %s483 = scalar_lea.sflag [#allocation4], 1
    %484 = vsyncpa %s483, 1
    %485 = vsyncpa [#allocation5], 1
    %s486 = scalar_lea.sflag [#allocation5], 1
    %487 = vsyncpa %s486, 1

</llo_original>
